<compile_context>
chip_gen: v5e
topology: v5e:2x2
jax: 0.10.0
libtpu: 0.0.40
codegen_flags: <defaults>
</compile_context>

<pallas_src>
import functools

import jax
import jax.numpy as jnp
from jax.experimental import pallas as pl
from jax.experimental.pallas import tpu as pltpu


_SQRT3 = 3.0 ** 0.5
_SQRT5 = 5.0 ** 0.5

# Bases expressible purely in alpha^2 = d2 * sigma^2  (no per-element sqrt).
_ALPHA2_BASES = {
    "gaussian": lambda a2: jnp.exp(-a2),
    "quadratic": lambda a2: a2,
    "inverse_quadratic": lambda a2: 1.0 / (1.0 + a2),
    "multiquadric": lambda a2: jnp.sqrt(1.0 + a2),
    "inverse_multiquadric": lambda a2: jax.lax.rsqrt(1.0 + a2),
}

# Bases that need alpha = sqrt(d2) * sigma itself (one sqrt per element).
_ALPHA_BASES = {
    "linear": lambda a: a,
    "spline": lambda a: (a * a) * jnp.log(a + 1.0),
    "poisson_one": lambda a: (a - 1.0) * jnp.exp(-a),
    "poisson_two": lambda a: ((a - 2.0) * 0.5) * a * jnp.exp(-a),
    "matern32": lambda a: (1.0 + _SQRT3 * a) * jnp.exp(-_SQRT3 * a),
    "matern52": lambda a: (1.0 + _SQRT5 * a + (5.0 / 3.0) * (a * a))
                          * jnp.exp(-_SQRT5 * a),
}

# Reference forms in terms of alpha (mirror the PyTorch module exactly).
_REF_BASES = {
    "gaussian": lambda a: jnp.exp(-(a * a)),
    "linear": lambda a: a,
    "quadratic": lambda a: a * a,
    "inverse_quadratic": lambda a: 1.0 / (1.0 + a * a),
    "multiquadric": lambda a: jnp.sqrt(1.0 + a * a),
    "inverse_multiquadric": lambda a: 1.0 / jnp.sqrt(1.0 + a * a),
    "spline": lambda a: (a * a) * jnp.log(a + 1.0),
    "poisson_one": lambda a: (a - 1.0) * jnp.exp(-a),
    "poisson_two": lambda a: ((a - 2.0) * 0.5) * a * jnp.exp(-a),
    "matern32": lambda a: (1.0 + _SQRT3 * a) * jnp.exp(-_SQRT3 * a),
    "matern52": lambda a: (1.0 + _SQRT5 * a + (5.0 / 3.0) * (a * a))
                          * jnp.exp(-_SQRT5 * a),
}


def _round_up(a, b):
    return ((a + b - 1) // b) * b


def _rbf_kernel(x_ref, xsq_ref, ct_ref, csq_ref, scale_ref, o_ref,
                *, basis_fn, needs_alpha):
    # x_ref:   (tn, in_f)   input rows
    # xsq_ref: (tn, 1)      precomputed ||x||^2 (f32)
    # ct_ref:  (in_f, to)   centres, pre-transposed -> clean (M,K)x(K,N) dot
    # csq_ref: (1, to)      precomputed ||c||^2 (f32)
    # scale_ref: (1, to)    sigma^2 (alpha^2 bases) or sigma (alpha bases), f32
    # o_ref:   (tn, to)
    xc = jnp.dot(x_ref[...], ct_ref[...],
                 preferred_element_type=jnp.float32)          # MXU, (tn, to)
    d2 = jnp.maximum(xsq_ref[...] + csq_ref[...] - 2.0 * xc, 0.0)
    scale = scale_ref[...]
    if needs_alpha:
        val = basis_fn(jnp.sqrt(d2) * scale)                  # alpha-based
    else:
        val = basis_fn(d2 * scale)                            # sqrt-free path
    o_ref[...] = val.astype(o_ref.dtype)


def rbf_forward(x, centres, sigmas, basis_function="gaussian",
                *, tile_n=None, tile_o=None):
    """x: (N, in_f), centres: (out_f, in_f), sigmas: (out_f,)."""
    basis_function = basis_function.lower()
    if basis_function in _ALPHA2_BASES:
        needs_alpha = False
        basis_fn = _ALPHA2_BASES[basis_function]
    elif basis_function in _ALPHA_BASES:
        needs_alpha = True
        basis_fn = _ALPHA_BASES[basis_function]
    else:
        raise ValueError(f"unknown basis function: {basis_function}")

    n, in_f = x.shape
    out_f, in_f2 = centres.shape
    assert in_f == in_f2
    assert sigmas.shape == (out_f,)

    # Tile defaults: tn multiple of 8, to multiple of 128 (lane-dense stores).
    if tile_n is None:
        tile_n = min(_round_up(n, 8), 256)
    if tile_o is None:
        tile_o = min(_round_up(out_f, 128), 256)

    n_pad = _round_up(n, tile_n)
    o_pad = _round_up(out_f, tile_o)

    xf = x
    cf = centres
    sf = sigmas.astype(jnp.float32)
    if n_pad != n:
        xf = jnp.pad(xf, ((0, n_pad - n), (0, 0)))
    if o_pad != out_f:
        cf = jnp.pad(cf, ((0, o_pad - out_f), (0, 0)))
        sf = jnp.pad(sf, (0, o_pad - out_f))

    # Hoist the cross-lane reductions / transpose out of the kernel (one-time
    # wrapper cost; centres/sigmas are weights).
    x_f32 = xf.astype(jnp.float32)
    c_f32 = cf.astype(jnp.float32)
    xsq = jnp.sum(x_f32 * x_f32, axis=-1, keepdims=True)       # (n_pad, 1)
    csq = jnp.sum(c_f32 * c_f32, axis=-1)[None, :]             # (1, o_pad)
    ct = cf.T                                                  # (in_f, o_pad)
    scale = (sf if needs_alpha else sf * sf)[None, :]          # (1, o_pad)

    kernel = functools.partial(_rbf_kernel, basis_fn=basis_fn,
                               needs_alpha=needs_alpha)

    grid = (n_pad // tile_n, o_pad // tile_o)
    out = pl.pallas_call(
        kernel,
        out_shape=jax.ShapeDtypeStruct((n_pad, o_pad), x.dtype),
        grid_spec=pltpu.PrefetchScalarGridSpec(
            num_scalar_prefetch=0,
            grid=grid,
            in_specs=[
                pl.BlockSpec((tile_n, in_f), lambda i, j: (i, 0)),   # x rows
                pl.BlockSpec((tile_n, 1), lambda i, j: (i, 0)),      # ||x||^2
                pl.BlockSpec((in_f, tile_o), lambda i, j: (0, j)),   # centres^T
                pl.BlockSpec((1, tile_o), lambda i, j: (0, j)),      # ||c||^2
                pl.BlockSpec((1, tile_o), lambda i, j: (0, j)),      # scale
            ],
            out_specs=pl.BlockSpec((tile_n, tile_o), lambda i, j: (i, j)),
        ),
        compiler_params=pltpu.CompilerParams(
            dimension_semantics=("parallel", "parallel"),
        ),
    )(xf, xsq, ct, csq, scale)

    return out[:n, :out_f]


def rbf_reference(x, centres, sigmas, basis_function="gaussian"):
    # Mirrors the PyTorch forward exactly (broadcast subtract, sum, sqrt, scale).
    basis_fn = _REF_BASES[basis_function.lower()]
    diff = x[:, None, :] - centres[None, :, :]            # (N, out_f, in_f)
    dist = jnp.sqrt(jnp.sum(diff * diff, axis=-1))        # (N, out_f)
    alpha = dist * sigmas[None, :]
    return basis_fn(alpha)


if __name__ == "__main__":
    key = jax.random.PRNGKey(0)
    k_x, k_c = jax.random.split(key)

    N, IN_FEATURES, OUT_FEATURES = 8, 32, 16

    # Deterministic parameter init matching RBF.reset_parameters():
    #   centres ~ N(0, 1), sigmas = 1.
    x = jax.random.normal(k_x, (N, IN_FEATURES), dtype=jnp.float32)
    centres = jax.random.normal(k_c, (OUT_FEATURES, IN_FEATURES),
                                dtype=jnp.float32)
    sigmas = jnp.ones((OUT_FEATURES,), dtype=jnp.float32)

    ok = True
    # Exercise both the sqrt-free (gaussian) and alpha (linear) code paths.
    for basis in ("gaussian", "linear"):
        out = rbf_forward(x, centres, sigmas, basis_function=basis)
        out = jax.block_until_ready(out)
        ref = rbf_reference(x, centres, sigmas, basis_function=basis)
        assert out.shape == (N, OUT_FEATURES)
        if not jnp.allclose(out, ref, atol=1e-4, rtol=1e-4):
            ok = False
            print(f"{basis}: max abs err = {jnp.max(jnp.abs(out - ref))}")

    assert ok
    print("KERNEL_OK")
</pallas_src>

<mosaic_0001>
module attributes {stable_mosaic.version = 11 : i64} {
  func.func @_rbf_kernel(%arg0: i32, %arg1: i32, %arg2: memref<8x32xf32, #tpu.memory_space<vmem>>, %arg3: memref<8x1xf32, #tpu.memory_space<vmem>>, %arg4: memref<32x128xf32, #tpu.memory_space<vmem>>, %arg5: memref<1x128xf32, #tpu.memory_space<vmem>>, %arg6: memref<1x128xf32, #tpu.memory_space<vmem>>, %arg7: memref<8x128xf32, #tpu.memory_space<vmem>>) attributes {dimension_semantics = [#tpu.dimension_semantics<parallel>, #tpu.dimension_semantics<parallel>], iteration_bounds = array<i64: 1, 1>, scalar_prefetch = 0 : i64, scratch_operands = 0 : i64, tpu.core_type = #tpu.core_type<tc>, window_params = [{transform_indices = @transform_0, window_bounds = array<i64: 8, 32>}, {transform_indices = @transform_1, window_bounds = array<i64: 8, 1>}, {transform_indices = @transform_2, window_bounds = array<i64: 32, 128>}, {transform_indices = @transform_3, window_bounds = array<i64: 1, 128>}, {transform_indices = @transform_4, window_bounds = array<i64: 1, 128>}, {transform_indices = @transform_5, window_bounds = array<i64: 8, 128>}]} {
    %c0 = arith.constant 0 : index
    %c0_0 = arith.constant 0 : index
    %0 = vector.load %arg2[%c0, %c0_0] : memref<8x32xf32, #tpu.memory_space<vmem>>, vector<8x32xf32>
    %c0_1 = arith.constant 0 : index
    %c0_2 = arith.constant 0 : index
    %1 = vector.load %arg4[%c0_1, %c0_2] : memref<32x128xf32, #tpu.memory_space<vmem>>, vector<32x128xf32>
    %cst = arith.constant dense<0.000000e+00> : vector<8x128xf32>
    %2 = tpu.matmul %0, %1, %cst {dimension_numbers = #tpu.dot_dimension_numbers<[1], [0], [0], [1], [0, 0, 1, 1], [], []>} : vector<8x32xf32>, vector<32x128xf32>, vector<8x128xf32> -> vector<8x128xf32>
    %c0_3 = arith.constant 0 : index
    %c0_4 = arith.constant 0 : index
    %3 = vector.load %arg3[%c0_3, %c0_4] : memref<8x1xf32, #tpu.memory_space<vmem>>, vector<8x1xf32>
    %c0_5 = arith.constant 0 : index
    %c0_6 = arith.constant 0 : index
    %4 = vector.load %arg5[%c0_5, %c0_6] : memref<1x128xf32, #tpu.memory_space<vmem>>, vector<1x128xf32>
    %5 = vector.broadcast %3 : vector<8x1xf32> to vector<8x128xf32>
    %6 = vector.broadcast %4 : vector<1x128xf32> to vector<8x128xf32>
    %7 = arith.addf %5, %6 : vector<8x128xf32>
    %cst_7 = arith.constant 2.000000e+00 : f32
    %8 = vector.broadcast %cst_7 : f32 to vector<8x128xf32>
    %9 = arith.mulf %8, %2 : vector<8x128xf32>
    %10 = arith.subf %7, %9 : vector<8x128xf32>
    %cst_8 = arith.constant 0.000000e+00 : f32
    %11 = vector.broadcast %cst_8 : f32 to vector<8x128xf32>
    %12 = arith.maximumf %10, %11 : vector<8x128xf32>
    %c0_9 = arith.constant 0 : index
    %c0_10 = arith.constant 0 : index
    %13 = vector.load %arg6[%c0_9, %c0_10] : memref<1x128xf32, #tpu.memory_space<vmem>>, vector<1x128xf32>
    %14 = vector.broadcast %13 : vector<1x128xf32> to vector<8x128xf32>
    %15 = arith.mulf %12, %14 : vector<8x128xf32>
    %cst_11 = arith.constant 0.000000e+00 : f32
    %16 = vector.broadcast %cst_11 : f32 to vector<8x128xf32>
    %17 = arith.subf %16, %15 : vector<8x128xf32>
    %18 = math.exp %17 : vector<8x128xf32>
    %c0_12 = arith.constant 0 : index
    %c0_13 = arith.constant 0 : index
    %19 = vector.load %arg7[%c0_12, %c0_13] : memref<8x128xf32, #tpu.memory_space<vmem>>, vector<8x128xf32>
    tpu.vector_store %arg7[%c0_12, %c0_13], %18 {strides = array<i32>} : memref<8x128xf32, #tpu.memory_space<vmem>>, vector<8x128xf32>,
    return
  }
  func.func @transform_0(%arg0: i32, %arg1: i32) -> (i32, i32) {
    %c0_i32 = arith.constant 0 : i32
    %c0_i32_0 = arith.constant 0 : i32
    return %arg0, %c0_i32 : i32, i32
  }
  func.func @transform_1(%arg0: i32, %arg1: i32) -> (i32, i32) {
    %c0_i32 = arith.constant 0 : i32
    %c0_i32_0 = arith.constant 0 : i32
    return %arg0, %c0_i32 : i32, i32
  }
  func.func @transform_2(%arg0: i32, %arg1: i32) -> (i32, i32) {
    %c0_i32 = arith.constant 0 : i32
    %c0_i32_0 = arith.constant 0 : i32
    return %c0_i32, %arg1 : i32, i32
  }
  func.func @transform_3(%arg0: i32, %arg1: i32) -> (i32, i32) {
    %c0_i32 = arith.constant 0 : i32
    %c0_i32_0 = arith.constant 0 : i32
    return %c0_i32, %arg1 : i32, i32
  }
  func.func @transform_4(%arg0: i32, %arg1: i32) -> (i32, i32) {
    %c0_i32 = arith.constant 0 : i32
    %c0_i32_0 = arith.constant 0 : i32
    return %c0_i32, %arg1 : i32, i32
  }
  func.func @transform_5(%arg0: i32, %arg1: i32) -> (i32, i32) {
    %c0_i32 = arith.constant 0 : i32
    return %arg0, %arg1 : i32, i32
  }
}

</mosaic_0001>

<llo_original>
// kernel: tpu_custom_call.1
$region0: #{tpu_custom_call.1}
  #allocation0 [shape = 'u32[]', space=smem, size = 0x4, offset = 0x4, fixed_abs, tag = 'smem constant byte address 0x4 - core index']
  #allocation1 [shape = 'u32[72,128]{1,0:T(1,128)}', space=vmem, size = 0x9000, scoped, tag = 'internal scratch']
  %s0 = inlined_call_operand.vmem [shape: f32[8,32], index: 0, kind: input, shape index: {}]
  %s1 = inlined_call_operand.vmem [shape: f32[8,1], index: 1, kind: input, shape index: {}]
  %s2 = inlined_call_operand.hbm [shape: f32[32,128], index: 2, kind: input, shape index: {}]
  %s3 = inlined_call_operand.vmem [shape: f32[1,128], index: 3, kind: input, shape index: {}]
  %s4 = inlined_call_operand.vmem [shape: f32[1,128], index: 4, kind: input, shape index: {}]
  %s5 = inlined_call_operand.hbm [shape: f32[8,128], index: 5, kind: output, shape index: {}]
  %s6 = sld [smem:[#allocation0]]
  $region34: #{tpu_custom_call.1} parent=0
    _
  %s8 = ssub.s32 1, %s6
  %s9 = scalar_select 0, %s8, %s6
  $region1: #{tpu_custom_call.1} parent=0
    #allocation2 [shape = 'u8[16384]{0}', space=vmem, size = 0x4000, scoped, tag = 'input window, operand 2, single buffered']
    #allocation3 [shape = 's32[1]{0}', space=sflag, size = 0x4, scoped, tag = 'scoped memory for tpu_custom_call.1']
    #allocation4 [shape = 's32[1]{0}', space=sflag, size = 0x4, scoped, tag = 'scoped memory for tpu_custom_call.1']
    #allocation5 [shape = 'u8[4096]{0}', space=vmem, size = 0x1000, scoped, tag = 'output window, operand 0, single buffered']
    %10 = vsyncpa [#allocation3], 0
    %11 = vsyncpa [#allocation4], 0
    // Predicated region
    $region2: #{tpu_custom_call.1} parent=1 // pred_check
      _
    $region3: #{tpu_custom_call.1} parent=1 // pred_check_branch
      %13 = sbr.rel (0) target = $region5
    $region4: #{tpu_custom_call.1} parent=1 // pred_region
      _
    $region5: #{tpu_custom_call.1} parent=1 // pred_fallthru
      _
    // Predicated region
    $region6: #{tpu_custom_call.1} parent=1 // pred_check
      _
    $region7: #{tpu_custom_call.1} parent=1 // pred_check_branch
      %15 = sbr.rel (0) target = $region9
    $region8: #{tpu_custom_call.1} parent=1 // pred_region
      _
    $region9: #{tpu_custom_call.1} parent=1 // pred_fallthru
      _
    // Predicated region
    $region10: #{tpu_custom_call.1} parent=1 // pred_check
      _
    $region11: #{tpu_custom_call.1} parent=1 // pred_check_branch
      %17 = sbr.rel (0) target = $region13
    $region12: #{tpu_custom_call.1} parent=1 // pred_region
      %19 = vsyncadd [#allocation3], 0
      %s20 = sshll.u32 %s2, 4
      %s21 = int_to_ptr.hbm [resolvable:$true] %s20
      %s22 = sshll.u32 [#allocation2], 4
      %s23 = int_to_ptr.vmem [resolvable:$true] %s22
      %28 = dma.hbm_to_vmem [thread:$0]  %s21, 512, %s23, [#allocation3], 128, 128, 8
    $region13: #{tpu_custom_call.1} parent=1 // pred_fallthru
      _
    // Predicated region
    $region14: #{tpu_custom_call.1} parent=1 // pred_check
      _
    $region15: #{tpu_custom_call.1} parent=1 // pred_check_branch
      %30 = sbr.rel (0) target = $region17
    $region16: #{tpu_custom_call.1} parent=1 // pred_region
      _
    $region17: #{tpu_custom_call.1} parent=1 // pred_fallthru
      _
    // Predicated region
    $region18: #{tpu_custom_call.1} parent=1 // pred_check
      _
    $region19: #{tpu_custom_call.1} parent=1 // pred_check_branch
      %32 = sbr.rel (0) target = $region21
    $region20: #{tpu_custom_call.1} parent=1 // pred_region
      _
    $region21: #{tpu_custom_call.1} parent=1 // pred_fallthru
      _
    // Predicated region
    $region22: #{tpu_custom_call.1} parent=1 // pred_check
      _
    $region23: #{tpu_custom_call.1} parent=1 // pred_check_branch
      %34 = sbr.rel (0) target = $region25
    $region24: #{tpu_custom_call.1} parent=1 // pred_region
      %36 = dma.done [#allocation3], 512
    $region25: #{tpu_custom_call.1} parent=1 // pred_fallthru
      _
    %v37 = vld [vmem:[%s0] sm:$0xff]
    %v38 = vld [vmem:[#allocation2] sm:$0xff]
    %v39 = vld [vmem:[#allocation2 + $0x8] sm:$0xff]
    %v40 = vld [vmem:[#allocation2 + $0x10] sm:$0xff]
    %v41 = vld [vmem:[#allocation2 + $0x18] sm:$0xff]
    %vm42 = vcmask 261120
    %v44 = vsel %vm42, %v37, 0
    %46 = vmatpush.msra.mxu0 0.0
    %47 = vmatpush.msra.mxu0 0.0
    %48 = vmatpush.msra.mxu0 0.0
    %49 = vmatpush.msra.mxu0 0.0
    %50 = vmatpush.msra.mxu0 0.0
    %51 = vmatpush.msra.mxu0 0.0
    %52 = vmatpush.msra.mxu0 0.0
    %53 = vmatpush.msra.mxu0 0.0
    %54 = vmatpush.msra.mxu0 0.0
    %55 = vmatpush.msra.mxu0 0.0
    %56 = vmatpush.msra.mxu0 0.0
    %57 = vmatpush.msra.mxu0 0.0
    %58 = vmatpush.msra.mxu0 %v41
    %59 = vmatpush.msra.mxu0 %v40
    %60 = vmatpush.msra.mxu0 %v39
    %61 = vmatpush.msra.mxu0 %v38
    %62 = vmatmul.f32.gmra.mxu0 %v44
    %v63 = vpop.f32.mrf.mxu0
    %v64 = vadd.f32 0.0, %v63
    %65 = vdwg.mxu0
    %v66 = vld [vmem:[%s1] sm:$0xff]
    %v67 = vld [vmem:[%s3] sm:$0x1]
    %69 = vset.pattern.permute.xlu0 0
    %70 = vperm.xlu0 %69, %v66
    %v71 = vpop.permute.xlu0 %70
    %v74 = vperm.slane %v67, 0
    %v76 = vadd.f32 %v71, %v74
    %v77 = vmul.f32 %v64, 2.0
    %v78 = vsub.f32 %v76, %v77
    %v79 = vmax.f32 %v78, 0.0
    %v80 = vld [vmem:[%s4] sm:$0x1]
    %v82 = vperm.slane %v80, 0
    %v84 = vmul.f32 %v79, %v82
    %v85 = vsub.f32 0.0, %v84
    %v86 = vmul.f32 %v85, 1.442695
    %v87 = vpow.pop %v86
    %88 = vst [vmem:[#allocation5] sm:$0xff] %v87
    // Predicated region
    $region26: #{tpu_custom_call.1} parent=1 // pred_check
      _
    $region27: #{tpu_custom_call.1} parent=1 // pred_check_branch
      %90 = sbr.rel (0) target = $region29
    $region28: #{tpu_custom_call.1} parent=1 // pred_region
      %92 = vsyncadd [#allocation4], 0
      %s94 = sshll.u32 [#allocation5], 4
      %s95 = int_to_ptr.vmem [resolvable:$true] %s94
      %s96 = sshll.u32 %s5, 4
      %s97 = int_to_ptr.hbm [resolvable:$true] %s96
      %99 = dma.vmem_to_hbm [thread:$0]  %s95, 128, %s97, [#allocation4]
    $region29: #{tpu_custom_call.1} parent=1 // pred_fallthru
      _
    // Predicated region
    $region30: #{tpu_custom_call.1} parent=1 // pred_check
      _
    $region31: #{tpu_custom_call.1} parent=1 // pred_check_branch
      %101 = sbr.rel (0) target = $region33
    $region32: #{tpu_custom_call.1} parent=1 // pred_region
      %103 = dma.done [#allocation4], 128
    $region33: #{tpu_custom_call.1} parent=1 // pred_fallthru
      _
    %104 = vsyncpa [#allocation3], 1
    %105 = vsyncpa [#allocation4], 1

</llo_original>
